<compile_context>
chip_gen: v6e
topology: v6e:2x2x1
jax: 0.10.0
libtpu: 0.0.40
codegen_flags: <defaults>
</compile_context>

<pallas_src>
import jax
import jax.numpy as jnp
from jax import lax
from jax.experimental import pallas as pl
from jax.experimental.pallas import tpu as pltpu

EPS = 1e-5  # PyTorch BatchNorm default eps


def _pick_tile(dim, pref):
    """Largest divisor of `dim` that is <= pref (falls back to full dim)."""
    for t in range(min(dim, pref), 0, -1):
        if dim % t == 0:
            return t
    return dim


# ----------------------------------------------------------------------------
# Kernel 1: fused Linear_overtime + BN(bn_before, per-timestep batch stats).
#           Time-parallel: one (Tb*B, Din)@(Din, Dout) matmul per grid step.
# ----------------------------------------------------------------------------
def _fc_bn_kernel(x_ref, w_ref, g_ref, be_ref, out_ref):
    Tb, B, Din = x_ref.shape
    Dout = w_ref.shape[1]
    x = x_ref[...].reshape(Tb * B, Din)
    y = jnp.dot(x, w_ref[...], preferred_element_type=jnp.float32)
    y = y.reshape(Tb, B, Dout)
    # MyBatchNorm_stepCompute: per-timestep statistics over the batch dim.
    # (fc bias omitted: exactly cancelled by the mean subtraction below.)
    # TODO(synk): running-stat bookkeeping / BN_start offset of the original
    # module is training-state plumbing and is not modeled here.
    mean = jnp.mean(y, axis=1, keepdims=True)
    var = jnp.mean((y - mean) ** 2, axis=1, keepdims=True)
    out_ref[...] = (y - mean) * lax.rsqrt(var + EPS) * g_ref[...] + be_ref[...]


def fc_bn(x, p, time_tile=32):
    T, B, Din = x.shape
    Dout = p['w'].shape[1]
    Tb = _pick_tile(T, time_tile)
    return pl.pallas_call(
        _fc_bn_kernel,
        out_shape=jax.ShapeDtypeStruct((T, B, Dout), jnp.float32),
        grid_spec=pltpu.PrefetchScalarGridSpec(
            num_scalar_prefetch=0, grid=(T // Tb,),
            in_specs=[pl.BlockSpec((Tb, B, Din), lambda t: (t, 0, 0)),
                      pl.BlockSpec((Din, Dout), lambda t: (0, 0)),
                      pl.BlockSpec((1, Dout), lambda t: (0, 0)),
                      pl.BlockSpec((1, Dout), lambda t: (0, 0))],
            out_specs=pl.BlockSpec((Tb, B, Dout), lambda t: (t, 0, 0))),
        compiler_params=pltpu.CompilerParams(dimension_semantics=("parallel",)),
    )(x, p['w'], p['gamma'], p['beta'])


# ----------------------------------------------------------------------------
# Kernel 2: IndRNN recurrence only:  h_t = relu(y_t + u * h_{t-1}).
#           Sequential ("arbitrary") grid over time blocks, Tb steps unrolled
#           per grid iteration, hidden state carried in VMEM scratch.
# ----------------------------------------------------------------------------
def _indrnn_kernel(y_ref, u_ref, h0_ref, out_ref, hlast_ref, h_scr):
    t = pl.program_id(0)

    @pl.when(t == 0)
    def _():
        h_scr[...] = h0_ref[...]

    Tb = y_ref.shape[0]
    u = u_ref[...]                      # (1, Dout) -> broadcasts over (B, Dout)
    h = h_scr[...]

    def body(i, h):
        h = jnp.maximum(y_ref[i] + u * h, 0.0)
        out_ref[i] = h
        return h

    h = lax.fori_loop(0, Tb, body, h, unroll=True)
    h_scr[...] = h

    @pl.when(t == pl.num_programs(0) - 1)
    def _():
        hlast_ref[...] = h


def indrnn(y, u, h0=None, time_tile=32):
    T, B, Dout = y.shape
    if h0 is None:
        h0 = jnp.zeros((B, Dout), jnp.float32)
    Tb = _pick_tile(T, time_tile)
    out, hlast = pl.pallas_call(
        _indrnn_kernel,
        out_shape=(jax.ShapeDtypeStruct((T, B, Dout), jnp.float32),
                   jax.ShapeDtypeStruct((B, Dout), jnp.float32)),
        grid_spec=pltpu.PrefetchScalarGridSpec(
            num_scalar_prefetch=0, grid=(T // Tb,),
            in_specs=[pl.BlockSpec((Tb, B, Dout), lambda t: (t, 0, 0)),
                      pl.BlockSpec((1, Dout), lambda t: (0, 0)),
                      pl.BlockSpec((B, Dout), lambda t: (0, 0))],
            out_specs=[pl.BlockSpec((Tb, B, Dout), lambda t: (t, 0, 0)),
                       pl.BlockSpec((B, Dout), lambda t: (0, 0))],
            scratch_shapes=[pltpu.VMEM((B, Dout), jnp.float32)]),
        compiler_params=pltpu.CompilerParams(dimension_semantics=("arbitrary",)),
    )(y, u, h0)
    return out, hlast


def fc_bn_indrnn(x, p, h0=None):
    """Linear_overtime + BN(bn_before) + IndRNN (the hot path of every layer)."""
    y = fc_bn(x, p)
    return indrnn(y, p['u'], h0)


# ----------------------------------------------------------------------------
# Kernel 3: standalone per-timestep BN (the 'extra_bn' of the last transition).
#           Time-parallel.
# ----------------------------------------------------------------------------
def _bn_kernel(x_ref, g_ref, b_ref, out_ref):
    x = x_ref[...]
    mean = jnp.mean(x, axis=1, keepdims=True)
    var = jnp.mean((x - mean) ** 2, axis=1, keepdims=True)
    out_ref[...] = (x - mean) * lax.rsqrt(var + EPS) * g_ref[...] + b_ref[...]


def bn_over_time(x, gamma, beta, time_tile=32):
    T, B, D = x.shape
    Tb = _pick_tile(T, time_tile)
    return pl.pallas_call(
        _bn_kernel,
        out_shape=jax.ShapeDtypeStruct((T, B, D), jnp.float32),
        grid_spec=pltpu.PrefetchScalarGridSpec(
            num_scalar_prefetch=0, grid=(T // Tb,),
            in_specs=[pl.BlockSpec((Tb, B, D), lambda t: (t, 0, 0)),
                      pl.BlockSpec((1, D), lambda t: (0, 0)),
                      pl.BlockSpec((1, D), lambda t: (0, 0))],
            out_specs=pl.BlockSpec((Tb, B, D), lambda t: (t, 0, 0))),
        compiler_params=pltpu.CompilerParams(dimension_semantics=("parallel",)),
    )(x, gamma, beta)


# ----------------------------------------------------------------------------
# Kernel 4: decoder linear  (T*B, E) @ (E, V) + b, tiled over rows x vocab.
# ----------------------------------------------------------------------------
def _decoder_kernel(x_ref, w_ref, b_ref, out_ref):
    out_ref[...] = jnp.dot(x_ref[...], w_ref[...],
                           preferred_element_type=jnp.float32) + b_ref[...]


def decoder_linear(x, w, b, tm=256, tn=256):
    N, K = x.shape
    V = w.shape[1]
    tm = tm if N % tm == 0 else N     # lane/sublane-aligned tiles when divisible,
    tn = tn if V % tn == 0 else V     # otherwise fall back to the full (small) dim
    return pl.pallas_call(
        _decoder_kernel,
        out_shape=jax.ShapeDtypeStruct((N, V), jnp.float32),
        grid_spec=pltpu.PrefetchScalarGridSpec(
            num_scalar_prefetch=0, grid=(N // tm, V // tn),
            in_specs=[pl.BlockSpec((tm, K), lambda i, j: (i, 0)),
                      pl.BlockSpec((K, tn), lambda i, j: (0, j)),
                      pl.BlockSpec((1, tn), lambda i, j: (0, j))],
            out_specs=pl.BlockSpec((tm, tn), lambda i, j: (i, j))),
        compiler_params=pltpu.CompilerParams(
            dimension_semantics=("parallel", "parallel")),
    )(x, w, b)


# ----------------------------------------------------------------------------
# Deterministic parameter construction (mirrors DenseNet.__init__ / init_weights).
# ----------------------------------------------------------------------------
def _kaiming_uniform(key, din, dout, a=8.0):
    bound = (6.0 / ((1.0 + a * a) * din)) ** 0.5        # kaiming_uniform(a=8, fan_in)
    return jax.random.uniform(key, (din, dout), jnp.float32, -bound, bound)


def _fc_bn_indrnn_params(key, din, dout, u_bound=1.0):
    kw, ku = jax.random.split(key)
    # fc bias omitted: init_weights sets it to 0 and the following BN mean
    # subtraction cancels any per-feature constant exactly.
    return {'w': _kaiming_uniform(kw, din, dout),
            'gamma': jnp.ones((1, dout), jnp.float32),          # norm weight = 1.0
            'beta': jnp.zeros((1, dout), jnp.float32),          # bias = 0.0
            'u': jax.random.uniform(ku, (1, dout), jnp.float32, 0.0, u_bound)}  # weight_hh


def build_densenet_params(key, outputclass, embed_size, growth_rate, block_config, bn_size):
    params = {}
    key, k = jax.random.split(key)
    params['encoder'] = jax.random.uniform(k, (outputclass, embed_size),
                                           jnp.float32, -0.01, 0.01)
    num_features = embed_size
    blocks, trans = [], []
    for i, num_layers in enumerate(block_config):
        layers = []
        for j in range(num_layers):
            nin = num_features + j * growth_rate
            key, k1, k2 = jax.random.split(key, 3)
            layers.append({'l1': _fc_bn_indrnn_params(k1, nin, bn_size * growth_rate),
                           'l2': _fc_bn_indrnn_params(k2, bn_size * growth_rate, growth_rate)})
        blocks.append(layers)
        num_features = num_features + num_layers * growth_rate
        if i != len(block_config) - 1:
            key, k1 = jax.random.split(key)
            trans.append({'fc': _fc_bn_indrnn_params(k1, num_features, num_features // 2),
                          'extra_bn': None})
            num_features = num_features // 2
    # extra_fc transition (lasttrans=True, bn_location='bn_before' -> extra_bn)
    key, k1 = jax.random.split(key)
    trans.append({'fc': _fc_bn_indrnn_params(k1, num_features, embed_size),
                  'extra_bn': {'gamma': jnp.ones((1, embed_size), jnp.float32),
                               'beta': jnp.zeros((1, embed_size), jnp.float32)}})
    key, kd = jax.random.split(key)
    params['decoder_w'] = jax.random.uniform(kd, (embed_size, outputclass),
                                             jnp.float32, -0.01, 0.01)
    params['decoder_b'] = jnp.zeros((1, outputclass), jnp.float32)
    params['blocks'] = blocks
    params['trans'] = trans
    return params


# ----------------------------------------------------------------------------
# DenseNet forward (mirrors DenseNet.forward with all dropout rates == 0).
# ----------------------------------------------------------------------------
def densenet_forward(tokens, params, embed_size):
    T, B = tokens.shape
    # embedding (embedded_dropout with p=0 == plain lookup); glue in plain JAX
    x = jnp.take(params['encoder'], tokens.reshape(-1), axis=0)
    x = x.reshape(T, B, embed_size).astype(jnp.float32)

    hidden_x = {}
    hid = 0
    num_blocks = len(params['blocks'])
    for i in range(num_blocks):
        # _DenseBlock of _DenseLayer's
        for layer in params['blocks'][i]:
            out1, h1 = fc_bn_indrnn(x, layer['l1'])      # fc1 + BN + IndRNN
            out2, h2 = fc_bn_indrnn(out1, layer['l2'])   # fc2 + BN + IndRNN
            # TODO(synk): the dense concat could be replaced by in-place slice
            # writes into a preallocated (T, B, F_final) buffer to avoid
            # rematerializing the growing feature tensor in HBM each layer.
            x = jnp.concatenate([x, out2], axis=2)       # dense concat along features
            hidden_x['hidden%d' % hid] = h1
            hidden_x['hidden%d' % (hid + 1)] = h2
            hid += 2
        if i != num_blocks - 1:                          # _Transition
            x, h = fc_bn_indrnn(x, params['trans'][i]['fc'])
            hidden_x['hidden%d' % hid] = h
            hid += 1
    # final _Transition (extra_fc, lasttrans=True)
    tp = params['trans'][-1]
    x, h = fc_bn_indrnn(x, tp['fc'])
    hidden_x['hidden%d' % hid] = h
    x = bn_over_time(x, tp['extra_bn']['gamma'], tp['extra_bn']['beta'])

    # decoder
    logits = decoder_linear(x.reshape(T * B, embed_size),
                            params['decoder_w'], params['decoder_b'])
    return logits, hidden_x


if __name__ == "__main__":
    # small, forward-consistent configuration
    outputclass = 50
    embed_size = 32
    growth_rate = 16
    bn_size = 2
    block_config = (2, 2)
    seq_len, batch = 8, 2

    key = jax.random.PRNGKey(0)
    kp, kt = jax.random.split(key)
    params = build_densenet_params(kp, outputclass, embed_size, growth_rate,
                                   block_config, bn_size)
    tokens = jax.random.randint(kt, (seq_len, batch), 0, outputclass, dtype=jnp.int32)

    logits, hidden_x = densenet_forward(tokens, params, embed_size)
    logits = jax.block_until_ready(logits)
    jax.tree_util.tree_map(jax.block_until_ready, hidden_x)

    assert logits.shape == (seq_len * batch, outputclass)
    assert logits.dtype == jnp.float32
    assert len(hidden_x) == 2 * sum(block_config) + len(block_config)  # 2/dense layer + 1/transition
    print("KERNEL_OK")
</pallas_src>

<mosaic_0001>
module attributes {stable_mosaic.version = 11 : i64} {
  func.func @_fc_bn_kernel(%arg0: i32, %arg1: memref<8x2x32xf32, #tpu.memory_space<vmem>>, %arg2: memref<32x32xf32, #tpu.memory_space<vmem>>, %arg3: memref<1x32xf32, #tpu.memory_space<vmem>>, %arg4: memref<1x32xf32, #tpu.memory_space<vmem>>, %arg5: memref<8x2x32xf32, #tpu.memory_space<vmem>>) attributes {dimension_semantics = [#tpu.dimension_semantics<parallel>], iteration_bounds = array<i64: 1>, scalar_prefetch = 0 : i64, scratch_operands = 0 : i64, tpu.core_type = #tpu.core_type<tc>, window_params = [{transform_indices = @transform_0, window_bounds = array<i64: 8, 2, 32>}, {pipeline_mode = #tpu.pipeline_mode<synchronous>, transform_indices = @transform_1, window_bounds = array<i64: 32, 32>}, {pipeline_mode = #tpu.pipeline_mode<synchronous>, transform_indices = @transform_2, window_bounds = array<i64: 1, 32>}, {pipeline_mode = #tpu.pipeline_mode<synchronous>, transform_indices = @transform_3, window_bounds = array<i64: 1, 32>}, {transform_indices = @transform_4, window_bounds = array<i64: 8, 2, 32>}]} {
    %c0 = arith.constant 0 : index
    %c0_0 = arith.constant 0 : index
    %c0_1 = arith.constant 0 : index
    %0 = vector.load %arg1[%c0, %c0_0, %c0_1] : memref<8x2x32xf32, #tpu.memory_space<vmem>>, vector<8x2x32xf32>
    %1 = vector.shape_cast %0 : vector<8x2x32xf32> to vector<16x32xf32>
    %c0_2 = arith.constant 0 : index
    %c0_3 = arith.constant 0 : index
    %2 = vector.load %arg2[%c0_2, %c0_3] : memref<32x32xf32, #tpu.memory_space<vmem>>, vector<32x32xf32>
    %cst = arith.constant dense<0.000000e+00> : vector<16x32xf32>
    %3 = tpu.matmul %1, %2, %cst {dimension_numbers = #tpu.dot_dimension_numbers<[1], [0], [0], [1], [0, 0, 1, 1], [], []>} : vector<16x32xf32>, vector<32x32xf32>, vector<16x32xf32> -> vector<16x32xf32>
    %4 = vector.shape_cast %3 : vector<16x32xf32> to vector<8x2x32xf32>
    %cst_4 = arith.constant dense<0.000000e+00> : vector<8x32xf32>
    %5 = vector.multi_reduction <add>, %4, %cst_4 [1] : vector<8x2x32xf32> to vector<8x32xf32>
    %6 = vector.shape_cast %5 : vector<8x32xf32> to vector<8x1x32xf32>
    %cst_5 = arith.constant 2.000000e+00 : f32
    %7 = vector.broadcast %cst_5 : f32 to vector<8x1x32xf32>
    %8 = arith.divf %6, %7 : vector<8x1x32xf32>
    %9 = vector.broadcast %8 : vector<8x1x32xf32> to vector<8x2x32xf32>
    %10 = arith.subf %4, %9 : vector<8x2x32xf32>
    %11 = arith.mulf %10, %10 : vector<8x2x32xf32>
    %cst_6 = arith.constant dense<0.000000e+00> : vector<8x32xf32>
    %12 = vector.multi_reduction <add>, %11, %cst_6 [1] : vector<8x2x32xf32> to vector<8x32xf32>
    %13 = vector.shape_cast %12 : vector<8x32xf32> to vector<8x1x32xf32>
    %cst_7 = arith.constant 2.000000e+00 : f32
    %14 = vector.broadcast %cst_7 : f32 to vector<8x1x32xf32>
    %15 = arith.divf %13, %14 : vector<8x1x32xf32>
    %16 = vector.broadcast %8 : vector<8x1x32xf32> to vector<8x2x32xf32>
    %17 = arith.subf %4, %16 : vector<8x2x32xf32>
    %cst_8 = arith.constant 9.99999974E-6 : f32
    %18 = vector.broadcast %cst_8 : f32 to vector<8x1x32xf32>
    %19 = arith.addf %15, %18 : vector<8x1x32xf32>
    %20 = math.rsqrt %19 : vector<8x1x32xf32>
    %21 = vector.broadcast %20 : vector<8x1x32xf32> to vector<8x2x32xf32>
    %22 = arith.mulf %17, %21 : vector<8x2x32xf32>
    %c0_9 = arith.constant 0 : index
    %c0_10 = arith.constant 0 : index
    %23 = vector.load %arg3[%c0_9, %c0_10] : memref<1x32xf32, #tpu.memory_space<vmem>>, vector<1x32xf32>
    %24 = vector.shape_cast %23 : vector<1x32xf32> to vector<1x1x32xf32>
    %25 = vector.broadcast %24 : vector<1x1x32xf32> to vector<8x2x32xf32>
    %26 = arith.mulf %22, %25 : vector<8x2x32xf32>
    %c0_11 = arith.constant 0 : index
    %c0_12 = arith.constant 0 : index
    %27 = vector.load %arg4[%c0_11, %c0_12] : memref<1x32xf32, #tpu.memory_space<vmem>>, vector<1x32xf32>
    %28 = vector.shape_cast %27 : vector<1x32xf32> to vector<1x1x32xf32>
    %29 = vector.broadcast %28 : vector<1x1x32xf32> to vector<8x2x32xf32>
    %30 = arith.addf %26, %29 : vector<8x2x32xf32>
    %c0_13 = arith.constant 0 : index
    %c0_14 = arith.constant 0 : index
    %c0_15 = arith.constant 0 : index
    %31 = vector.load %arg5[%c0_13, %c0_14, %c0_15] : memref<8x2x32xf32, #tpu.memory_space<vmem>>, vector<8x2x32xf32>
    tpu.vector_store %arg5[%c0_13, %c0_14, %c0_15], %30 {strides = array<i32>} : memref<8x2x32xf32, #tpu.memory_space<vmem>>, vector<8x2x32xf32>,
    return
  }
  func.func @transform_0(%arg0: i32) -> (i32, i32, i32) {
    %c0_i32 = arith.constant 0 : i32
    %c0_i32_0 = arith.constant 0 : i32
    %c0_i32_1 = arith.constant 0 : i32
    return %arg0, %c0_i32, %c0_i32_0 : i32, i32, i32
  }
  func.func @transform_1(%arg0: i32) -> (i32, i32) {
    %c0_i32 = arith.constant 0 : i32
    %c0_i32_0 = arith.constant 0 : i32
    %c0_i32_1 = arith.constant 0 : i32
    return %c0_i32, %c0_i32_0 : i32, i32
  }
  func.func @transform_2(%arg0: i32) -> (i32, i32) {
    %c0_i32 = arith.constant 0 : i32
    %c0_i32_0 = arith.constant 0 : i32
    %c0_i32_1 = arith.constant 0 : i32
    return %c0_i32, %c0_i32_0 : i32, i32
  }
  func.func @transform_3(%arg0: i32) -> (i32, i32) {
    %c0_i32 = arith.constant 0 : i32
    %c0_i32_0 = arith.constant 0 : i32
    %c0_i32_1 = arith.constant 0 : i32
    return %c0_i32, %c0_i32_0 : i32, i32
  }
  func.func @transform_4(%arg0: i32) -> (i32, i32, i32) {
    %c0_i32 = arith.constant 0 : i32
    %c0_i32_0 = arith.constant 0 : i32
    %c0_i32_1 = arith.constant 0 : i32
    return %arg0, %c0_i32, %c0_i32_0 : i32, i32, i32
  }
}

</mosaic_0001>

<llo_original>
// kernel: tpu_custom_call.1
$region0: #{tpu_custom_call.1}
  #allocation0 [shape = 'u32[]', space=smem, size = 0x4, offset = 0x4, fixed_abs, tag = 'smem constant byte address 0x4 - core index']
  #allocation1 [shape = 'u32[144,128]{1,0:T(1,128)}', space=vmem, size = 0x12000, scoped, tag = 'internal scratch']
  %s0 = inlined_call_operand.hbm [shape: f32[8,2,32], index: 0, kind: input, shape index: {}]
  %s1 = inlined_call_operand.hbm [shape: f32[32,32], index: 1, kind: input, shape index: {}]
  %s2 = inlined_call_operand.vmem [shape: f32[1,32], index: 2, kind: input, shape index: {}]
  %s3 = inlined_call_operand.vmem [shape: f32[1,32], index: 3, kind: input, shape index: {}]
  %s4 = inlined_call_operand.hbm [shape: f32[8,2,32], index: 4, kind: output, shape index: {}]
  %s5 = sld [smem:[#allocation0]]
  $region34: #{tpu_custom_call.1} parent=0
    _
  %s7 = ssub.s32 1, %s5
  %s8 = scalar_select 0, %s7, %s5
  $region1: #{tpu_custom_call.1} parent=0
    #allocation2 [shape = 'u8[8192]{0}', space=vmem, size = 0x2000, scoped, tag = 'input window, operand 0, single buffered']
    #allocation3 [shape = 's32[1]{0}', space=sflag, size = 0x4, scoped, tag = 'scoped memory for tpu_custom_call.1']
    #allocation4 [shape = 's32[1]{0}', space=sflag, size = 0x4, scoped, tag = 'scoped memory for tpu_custom_call.1']
    #allocation5 [shape = 'u8[16384]{0}', space=vmem, size = 0x4000, scoped, tag = 'input window, operand 1, single buffered']
    #allocation6 [shape = 's32[1]{0}', space=sflag, size = 0x4, scoped, tag = 'scoped memory for tpu_custom_call.1']
    #allocation7 [shape = 'u8[8192]{0}', space=vmem, size = 0x2000, scoped, tag = 'output window, operand 0, single buffered']
    %9 = vsyncpa [#allocation3], 0
    %10 = vsyncpa [#allocation6], 0
    %11 = vsyncpa [#allocation4], 0
    // Predicated region
    $region2: #{tpu_custom_call.1} parent=1 // pred_check
      _
    $region3: #{tpu_custom_call.1} parent=1 // pred_check_branch
      %13 = sbr.rel (0) target = $region5
    $region4: #{tpu_custom_call.1} parent=1 // pred_region
      %s15 = ssub.s32 256, 256
      %16 = vsyncadd [#allocation3], %s15
      %s17 = sshll.u32 [#allocation2], 4
      %s18 = int_to_ptr.vmem [resolvable:$true] %s17
      %23 = dma.hbm_to_vmem [thread:$0]  %s0, 256, %s18, [#allocation3], 32, 32, 2
    $region5: #{tpu_custom_call.1} parent=1 // pred_fallthru
      _
    // Predicated region
    $region6: #{tpu_custom_call.1} parent=1 // pred_check
      _
    $region7: #{tpu_custom_call.1} parent=1 // pred_check_branch
      %25 = sbr.rel (0) target = $region9
    $region8: #{tpu_custom_call.1} parent=1 // pred_region
      %s27 = ssub.s32 512, 512
      %28 = vsyncadd [#allocation6], %s27
      %s29 = sshll.u32 [#allocation5], 4
      %s30 = int_to_ptr.vmem [resolvable:$true] %s29
      %35 = dma.hbm_to_vmem [thread:$0]  %s1, 512, %s30, [#allocation6], 128, 128, 8
    $region9: #{tpu_custom_call.1} parent=1 // pred_fallthru
      _
    // Predicated region
    $region10: #{tpu_custom_call.1} parent=1 // pred_check
      _
    $region11: #{tpu_custom_call.1} parent=1 // pred_check_branch
      %37 = sbr.rel (0) target = $region13
    $region12: #{tpu_custom_call.1} parent=1 // pred_region
      _
    $region13: #{tpu_custom_call.1} parent=1 // pred_fallthru
      _
    // Predicated region
    $region14: #{tpu_custom_call.1} parent=1 // pred_check
      _
    $region15: #{tpu_custom_call.1} parent=1 // pred_check_branch
      %39 = sbr.rel (0) target = $region17
    $region16: #{tpu_custom_call.1} parent=1 // pred_region
      _
    $region17: #{tpu_custom_call.1} parent=1 // pred_fallthru
      _
    // Predicated region
    $region18: #{tpu_custom_call.1} parent=1 // pred_check
      _
    $region19: #{tpu_custom_call.1} parent=1 // pred_check_branch
      %41 = sbr.rel (0) target = $region21
    $region20: #{tpu_custom_call.1} parent=1 // pred_region
      %42 = dma.done [#allocation3], 256
    $region21: #{tpu_custom_call.1} parent=1 // pred_fallthru
      _
    // Predicated region
    $region22: #{tpu_custom_call.1} parent=1 // pred_check
      _
    $region23: #{tpu_custom_call.1} parent=1 // pred_check_branch
      %44 = sbr.rel (0) target = $region25
    $region24: #{tpu_custom_call.1} parent=1 // pred_region
      %45 = dma.done [#allocation6], 512
    $region25: #{tpu_custom_call.1} parent=1 // pred_fallthru
      _
    %v46 = vld [vmem:[#allocation2] sm:$0x3]
    %v47 = vld [vmem:[#allocation2 + $0x2] sm:$0x3]
    %v48 = vld [vmem:[#allocation2 + $0x4] sm:$0x3]
    %v49 = vld [vmem:[#allocation2 + $0x6] sm:$0x3]
    %v50 = vld [vmem:[#allocation2 + $0x8] sm:$0x3]
    %v51 = vld [vmem:[#allocation2 + $0xa] sm:$0x3]
    %v52 = vld [vmem:[#allocation2 + $0xc] sm:$0x3]
    %v53 = vld [vmem:[#allocation2 + $0xe] sm:$0x3]
    %v54 = vld [vmem:[#allocation5] sm:$0xff]
    %v55 = vld [vmem:[#allocation5 + $0x8] sm:$0xff]
    %v56 = vld [vmem:[#allocation5 + $0x10] sm:$0xff]
    %v57 = vld [vmem:[#allocation5 + $0x18] sm:$0xff]
    %v66 = vcombine.low %v46, %v47
    %v67 = vcombine.low %v48, %v49
    %v69 = vunpack.c.l.s4 1983009808
    %v70 = vunpack.c.0.s8 %v69
    %v71 = vlaneseq
    %v72 = vshrl.u32 %v71, 7
    %v73 = vsub.s32 %v70, %v72
    %v74 = vrot.slane %v66, %v73
    %v76 = vunpack.c.l.s4 1983009808
    %v77 = vunpack.c.0.s8 %v76
    %v78 = vlaneseq
    %v79 = vshrl.u32 %v78, 7
    %v80 = vsub.s32 %v77, %v79
    %v81 = vrot.slane %v67, %v80
    %v82 = vcombine.low %v74, %v81
    %v83 = vcombine.low %v50, %v51
    %v84 = vcombine.low %v52, %v53
    %v86 = vunpack.c.l.s4 1983009808
    %v87 = vunpack.c.0.s8 %v86
    %v88 = vlaneseq
    %v89 = vshrl.u32 %v88, 7
    %v90 = vsub.s32 %v87, %v89
    %v91 = vrot.slane %v83, %v90
    %v93 = vunpack.c.l.s4 1983009808
    %v94 = vunpack.c.0.s8 %v93
    %v95 = vlaneseq
    %v96 = vshrl.u32 %v95, 7
    %v97 = vsub.s32 %v94, %v96
    %v98 = vrot.slane %v84, %v97
    %v99 = vcombine.low %v91, %v98
    %vm100 = vcmask 261120
    %v101 = vsel %vm100, %v82, 0
    %v103 = vsel %vm100, %v99, 0
    %105 = vmatprep.subr.mxu0 0.0
    %106 = vmatpush1.msra.mxu0 0.0
    %107 = vmatprep.subr.mxu0 0.0
    %108 = vmatpush1.msra.mxu0 0.0
    %109 = vmatprep.subr.mxu0 0.0
    %110 = vmatpush1.msra.mxu0 0.0
    %111 = vmatprep.subr.mxu0 0.0
    %112 = vmatpush1.msra.mxu0 0.0
    %113 = vmatprep.subr.mxu0 0.0
    %114 = vmatpush1.msra.mxu0 0.0
    %115 = vmatprep.subr.mxu0 0.0
    %116 = vmatpush1.msra.mxu0 0.0
    %117 = vmatprep.subr.mxu0 0.0
    %118 = vmatpush1.msra.mxu0 0.0
    %119 = vmatprep.subr.mxu0 0.0
    %120 = vmatpush1.msra.mxu0 0.0
    %121 = vmatprep.subr.mxu0 0.0
    %122 = vmatpush1.msra.mxu0 0.0
    %123 = vmatprep.subr.mxu0 0.0
    %124 = vmatpush1.msra.mxu0 0.0
    %125 = vmatprep.subr.mxu0 0.0
    %126 = vmatpush1.msra.mxu0 0.0
    %127 = vmatprep.subr.mxu0 0.0
    %128 = vmatpush1.msra.mxu0 0.0
    %129 = vmatprep.subr.mxu0 0.0
    %130 = vmatpush1.msra.mxu0 %v57
    %131 = vmatprep.subr.mxu0 0.0
    %132 = vmatpush1.msra.mxu0 %v56
    %133 = vmatprep.subr.mxu0 0.0
    %134 = vmatpush1.msra.mxu0 %v55
    %135 = vmatprep.subr.mxu0 0.0
    %136 = vmatpush1.msra.mxu0 %v54
    %137 = vmatprep.subr.mxu0 0.0
    %138 = vmatpush2.msra.mxu0 0.0
    %139 = vmatprep.subr.mxu0 0.0
    %140 = vmatpush2.msra.mxu0 0.0
    %141 = vmatprep.subr.mxu0 0.0
    %142 = vmatpush2.msra.mxu0 0.0
    %143 = vmatprep.subr.mxu0 0.0
    %144 = vmatpush2.msra.mxu0 0.0
    %145 = vmatprep.subr.mxu0 0.0
    %146 = vmatpush2.msra.mxu0 0.0
    %147 = vmatprep.subr.mxu0 0.0
    %148 = vmatpush2.msra.mxu0 0.0
    %149 = vmatprep.subr.mxu0 0.0
    %150 = vmatpush2.msra.mxu0 0.0
    %151 = vmatprep.subr.mxu0 0.0
    %152 = vmatpush2.msra.mxu0 0.0
    %153 = vmatprep.subr.mxu0 0.0
    %154 = vmatpush2.msra.mxu0 0.0
    %155 = vmatprep.subr.mxu0 0.0
    %156 = vmatpush2.msra.mxu0 0.0
    %157 = vmatprep.subr.mxu0 0.0
    %158 = vmatpush2.msra.mxu0 0.0
    %159 = vmatprep.subr.mxu0 0.0
    %160 = vmatpush2.msra.mxu0 0.0
    %161 = vmatprep.subr.mxu0 0.0
    %162 = vmatpush2.msra.mxu0 0.0
    %163 = vmatprep.subr.mxu0 0.0
    %164 = vmatpush2.msra.mxu0 0.0
    %165 = vmatprep.subr.mxu0 0.0
    %166 = vmatpush2.msra.mxu0 0.0
    %167 = vmatprep.subr.mxu0 0.0
    %168 = vmatpush2.msra.mxu0 0.0
    %169 = vmatprep.mubr.f32.mxu0 0.0
    %170 = vmatmul.mubr.f32.gmra.mxu0 %v101
    %v171 = vpop.f32.mrf.mxu0
    %v172 = vadd.f32 0.0, %v171
    %v173 = vpop.f32.mrf.mxu0
    %174 = vmatprep.mubr.f32.mxu0 0.0
    %175 = vmatmul.mubr.f32.gmra.mxu0 %v103
    %v176 = vpop.f32.mrf.mxu0
    %v177 = vadd.f32 0.0, %v176
    %v178 = vpop.f32.mrf.mxu0
    %179 = vdwg.mxu0
    %v182 = vcombine.high %v172, %v172
    %v184 = vunpack.c.l.s4 1983009808
    %v185 = vunpack.c.0.s8 %v184
    %v186 = vlaneseq
    %v187 = vshrl.u32 %v186, 7
    %v188 = vsub.s32 %v185, %v187
    %v189 = vrot.slane %v172, %v188
    %v191 = vunpack.c.l.s4 1983009808
    %v192 = vunpack.c.0.s8 %v191
    %v193 = vlaneseq
    %v194 = vshrl.u32 %v193, 7
    %v195 = vsub.s32 %v192, %v194
    %v196 = vrot.slane %v182, %v195
    %v197 = vcombine.high %v189, %v189
    %v198 = vcombine.high %v196, %v196
    %v199 = vcombine.high %v177, %v177
    %v201 = vunpack.c.l.s4 1983009808
    %v202 = vunpack.c.0.s8 %v201
    %v203 = vlaneseq
    %v204 = vshrl.u32 %v203, 7
    %v205 = vsub.s32 %v202, %v204
    %v206 = vrot.slane %v177, %v205
    %v208 = vunpack.c.l.s4 1983009808
    %v209 = vunpack.c.0.s8 %v208
    %v210 = vlaneseq
    %v211 = vshrl.u32 %v210, 7
    %v212 = vsub.s32 %v209, %v211
    %v213 = vrot.slane %v199, %v212
    %v214 = vcombine.high %v206, %v206
    %v215 = vcombine.high %v213, %v213
    %vm224 = vcmask 254976
    %v225 = vsel %vm224, %v189, 0.0
    %v226 = vrot.slane %v225, 4
    %v227 = vadd.f32 %v225, %v226
    %v228 = vrot.slane %v227, 2
    %v229 = vadd.f32 %v227, %v228
    %v230 = vrot.slane %v229, 1
    %v231 = vadd.f32 %v229, %v230
    %v232 = vsel %vm224, %v197, 0.0
    %v233 = vrot.slane %v232, 4
    %v234 = vadd.f32 %v232, %v233
    %v235 = vrot.slane %v234, 2
    %v236 = vadd.f32 %v234, %v235
    %v237 = vrot.slane %v236, 1
    %v238 = vadd.f32 %v236, %v237
    %v239 = vsel %vm224, %v196, 0.0
    %v240 = vrot.slane %v239, 4
    %v241 = vadd.f32 %v239, %v240
    %v242 = vrot.slane %v241, 2
    %v243 = vadd.f32 %v241, %v242
    %v244 = vrot.slane %v243, 1
    %v245 = vadd.f32 %v243, %v244
    %v246 = vsel %vm224, %v198, 0.0
    %v247 = vrot.slane %v246, 4
    %v248 = vadd.f32 %v246, %v247
    %v249 = vrot.slane %v248, 2
    %v250 = vadd.f32 %v248, %v249
    %v251 = vrot.slane %v250, 1
    %v252 = vadd.f32 %v250, %v251
    %v253 = vsel %vm224, %v206, 0.0
    %v254 = vrot.slane %v253, 4
    %v255 = vadd.f32 %v253, %v254
    %v256 = vrot.slane %v255, 2
    %v257 = vadd.f32 %v255, %v256
    %v258 = vrot.slane %v257, 1
    %v259 = vadd.f32 %v257, %v258
    %v260 = vsel %vm224, %v214, 0.0
    %v261 = vrot.slane %v260, 4
    %v262 = vadd.f32 %v260, %v261
    %v263 = vrot.slane %v262, 2
    %v264 = vadd.f32 %v262, %v263
    %v265 = vrot.slane %v264, 1
    %v266 = vadd.f32 %v264, %v265
    %v267 = vsel %vm224, %v213, 0.0
    %v268 = vrot.slane %v267, 4
    %v269 = vadd.f32 %v267, %v268
    %v270 = vrot.slane %v269, 2
    %v271 = vadd.f32 %v269, %v270
    %v272 = vrot.slane %v271, 1
    %v273 = vadd.f32 %v271, %v272
    %v274 = vsel %vm224, %v215, 0.0
    %v275 = vrot.slane %v274, 4
    %v276 = vadd.f32 %v274, %v275
    %v277 = vrot.slane %v276, 2
    %v278 = vadd.f32 %v276, %v277
    %v279 = vrot.slane %v278, 1
    %v280 = vadd.f32 %v278, %v279
    %v281 = vrcp.pop 2.0
    %v282 = vmul.f32 %v231, %v281
    %v283 = vmul.f32 %v238, %v281
    %v284 = vmul.f32 %v245, %v281
    %v285 = vmul.f32 %v252, %v281
    %v286 = vmul.f32 %v259, %v281
    %v287 = vmul.f32 %v266, %v281
    %v288 = vmul.f32 %v273, %v281
    %v289 = vmul.f32 %v280, %v281
    %v290 = vsub.f32 %v189, %v282
    %v291 = vsub.f32 %v197, %v283
    %v292 = vsub.f32 %v196, %v284
    %v293 = vsub.f32 %v198, %v285
    %v294 = vsub.f32 %v206, %v286
    %v295 = vsub.f32 %v214, %v287
    %v296 = vsub.f32 %v213, %v288
    %v297 = vsub.f32 %v215, %v289
    %v298 = vmul.f32 %v290, %v290
    %v299 = vmul.f32 %v291, %v291
    %v300 = vmul.f32 %v292, %v292
    %v301 = vmul.f32 %v293, %v293
    %v302 = vmul.f32 %v294, %v294
    %v303 = vmul.f32 %v295, %v295
    %v304 = vmul.f32 %v296, %v296
    %v305 = vmul.f32 %v297, %v297
    %v306 = vsel %vm224, %v298, 0.0
    %v307 = vrot.slane %v306, 4
    %v308 = vadd.f32 %v306, %v307
    %v309 = vrot.slane %v308, 2
    %v310 = vadd.f32 %v308, %v309
    %v311 = vrot.slane %v310, 1
    %v312 = vadd.f32 %v310, %v311
    %v313 = vsel %vm224, %v299, 0.0
    %v314 = vrot.slane %v313, 4
    %v315 = vadd.f32 %v313, %v314
    %v316 = vrot.slane %v315, 2
    %v317 = vadd.f32 %v315, %v316
    %v318 = vrot.slane %v317, 1
    %v319 = vadd.f32 %v317, %v318
    %v320 = vsel %vm224, %v300, 0.0
    %v321 = vrot.slane %v320, 4
    %v322 = vadd.f32 %v320, %v321
    %v323 = vrot.slane %v322, 2
    %v324 = vadd.f32 %v322, %v323
    %v325 = vrot.slane %v324, 1
    %v326 = vadd.f32 %v324, %v325
    %v327 = vsel %vm224, %v301, 0.0
    %v328 = vrot.slane %v327, 4
    %v329 = vadd.f32 %v327, %v328
    %v330 = vrot.slane %v329, 2
    %v331 = vadd.f32 %v329, %v330
    %v332 = vrot.slane %v331, 1
    %v333 = vadd.f32 %v331, %v332
    %v334 = vsel %vm224, %v302, 0.0
    %v335 = vrot.slane %v334, 4
    %v336 = vadd.f32 %v334, %v335
    %v337 = vrot.slane %v336, 2
    %v338 = vadd.f32 %v336, %v337
    %v339 = vrot.slane %v338, 1
    %v340 = vadd.f32 %v338, %v339
    %v341 = vsel %vm224, %v303, 0.0
    %v342 = vrot.slane %v341, 4
    %v343 = vadd.f32 %v341, %v342
    %v344 = vrot.slane %v343, 2
    %v345 = vadd.f32 %v343, %v344
    %v346 = vrot.slane %v345, 1
    %v347 = vadd.f32 %v345, %v346
    %v348 = vsel %vm224, %v304, 0.0
    %v349 = vrot.slane %v348, 4
    %v350 = vadd.f32 %v348, %v349
    %v351 = vrot.slane %v350, 2
    %v352 = vadd.f32 %v350, %v351
    %v353 = vrot.slane %v352, 1
    %v354 = vadd.f32 %v352, %v353
    %v355 = vsel %vm224, %v305, 0.0
    %v356 = vrot.slane %v355, 4
    %v357 = vadd.f32 %v355, %v356
    %v358 = vrot.slane %v357, 2
    %v359 = vadd.f32 %v357, %v358
    %v360 = vrot.slane %v359, 1
    %v361 = vadd.f32 %v359, %v360
    %v362 = vmul.f32 %v312, %v281
    %v363 = vmul.f32 %v319, %v281
    %v364 = vmul.f32 %v326, %v281
    %v365 = vmul.f32 %v333, %v281
    %v366 = vmul.f32 %v340, %v281
    %v367 = vmul.f32 %v347, %v281
    %v368 = vmul.f32 %v354, %v281
    %v369 = vmul.f32 %v361, %v281
    %v370 = vadd.f32 %v362, 1e-05
    %v371 = vadd.f32 %v363, 1e-05
    %v372 = vadd.f32 %v364, 1e-05
    %v373 = vadd.f32 %v365, 1e-05
    %v374 = vadd.f32 %v366, 1e-05
    %v375 = vadd.f32 %v367, 1e-05
    %v376 = vadd.f32 %v368, 1e-05
    %v377 = vadd.f32 %v369, 1e-05
    %v378 = vrsqrt.pop %v370
    %v379 = vrsqrt.pop %v371
    %v380 = vrsqrt.pop %v372
    %v381 = vrsqrt.pop %v373
    %v382 = vrsqrt.pop %v374
    %v383 = vrsqrt.pop %v375
    %v384 = vrsqrt.pop %v376
    %v385 = vrsqrt.pop %v377
    %v386 = vmul.f32 %v290, %v378
    %v387 = vmul.f32 %v291, %v379
    %v388 = vmul.f32 %v292, %v380
    %v389 = vmul.f32 %v293, %v381
    %v390 = vmul.f32 %v294, %v382
    %v391 = vmul.f32 %v295, %v383
    %v392 = vmul.f32 %v296, %v384
    %v393 = vmul.f32 %v297, %v385
    %v394 = vld [vmem:[%s2] sm:$0x1]
    %v396 = vlaneseq
    %v397 = vshrl.u32 %v396, 7
    %v398 = vsub.s32 0, %v397
    %v399 = vrot.slane %v394, %v398
    %v401 = vmul.f32 %v386, %v399
    %v402 = vmul.f32 %v387, %v399
    %v403 = vmul.f32 %v388, %v399
    %v404 = vmul.f32 %v389, %v399
    %v405 = vmul.f32 %v390, %v399
    %v406 = vmul.f32 %v391, %v399
    %v407 = vmul.f32 %v392, %v399
    %v408 = vmul.f32 %v393, %v399
    %v409 = vld [vmem:[%s3] sm:$0x1]
    %v411 = vlaneseq
    %v412 = vshrl.u32 %v411, 7
    %v413 = vsub.s32 0, %v412
    %v414 = vrot.slane %v409, %v413
    %v416 = vadd.f32 %v401, %v414
    %v417 = vadd.f32 %v402, %v414
    %v418 = vadd.f32 %v403, %v414
    %v419 = vadd.f32 %v404, %v414
    %v420 = vadd.f32 %v405, %v414
    %v421 = vadd.f32 %v406, %v414
    %v422 = vadd.f32 %v407, %v414
    %v423 = vadd.f32 %v408, %v414
    %424 = vst.msk [vmem:[#allocation7] sm:$0x3] %vm224, %v416
    %425 = vst.msk [vmem:[#allocation7 + $0x2] sm:$0x3] %vm224, %v417
    %426 = vst.msk [vmem:[#allocation7 + $0x4] sm:$0x3] %vm224, %v418
    %427 = vst.msk [vmem:[#allocation7 + $0x6] sm:$0x3] %vm224, %v419
    %428 = vst.msk [vmem:[#allocation7 + $0x8] sm:$0x3] %vm224, %v420
    %429 = vst.msk [vmem:[#allocation7 + $0xa] sm:$0x3] %vm224, %v421
    %430 = vst.msk [vmem:[#allocation7 + $0xc] sm:$0x3] %vm224, %v422
    %431 = vst.msk [vmem:[#allocation7 + $0xe] sm:$0x3] %vm224, %v423
    // Predicated region
    $region26: #{tpu_custom_call.1} parent=1 // pred_check
      _
    $region27: #{tpu_custom_call.1} parent=1 // pred_check_branch
      %433 = sbr.rel (0) target = $region29
    $region28: #{tpu_custom_call.1} parent=1 // pred_region
      %s435 = ssub.s32 256, 256
      %436 = vsyncadd [#allocation4], %s435
      %s437 = sshll.u32 [#allocation7], 4
      %s438 = int_to_ptr.vmem [resolvable:$true] %s437
      %443 = dma.vmem_to_hbm [thread:$0]  %s438, 256, %s4, [#allocation4], 32, 32, 2
    $region29: #{tpu_custom_call.1} parent=1 // pred_fallthru
      _
    // Predicated region
    $region30: #{tpu_custom_call.1} parent=1 // pred_check
      _
    $region31: #{tpu_custom_call.1} parent=1 // pred_check_branch
      %445 = sbr.rel (0) target = $region33
    $region32: #{tpu_custom_call.1} parent=1 // pred_region
      %446 = dma.done [#allocation4], 256
    $region33: #{tpu_custom_call.1} parent=1 // pred_fallthru
      _
    %447 = vsyncpa [#allocation3], 1
    %448 = vsyncpa [#allocation6], 1
    %449 = vsyncpa [#allocation4], 1

</llo_original>
